<compile_context>
chip_gen: v7x
topology: tpu7x:2x2x1
jax: 0.10.0
libtpu: 0.0.40
codegen_flags: <defaults>
</compile_context>

<pallas_src>
import jax
import jax.numpy as jnp
from jax import lax
from jax.experimental import pallas as pl
from jax.experimental.pallas import tpu as pltpu

_UNROLL_LIMIT = 64  # fully unroll the k-loop up to this many channels-per-group


def _round_up(x: int, m: int) -> int:
    return -(-x // m) * m


def _make_kernel(groups: int, cpg: int):
    def kernel(x_ref, o_ref):
        # x_ref / o_ref are (B_TILE, C, T_TILE) VMEM tiles.
        if cpg <= _UNROLL_LIMIT:
            # Unrolled Python loop: LLO scheduler sees every move.
            for k in range(cpg):
                rows = [x_ref[:, g * cpg + k:g * cpg + k + 1, :]
                        for g in range(groups)]
                # One contiguous, unmasked store of `groups` channels.
                o_ref[:, k * groups:(k + 1) * groups, :] = jnp.concatenate(rows, axis=1)
        else:
            # Very large cpg: bound code size with a rolled loop.
            def body(k, carry):
                rows = [x_ref[:, pl.ds(g * cpg + k, 1), :] for g in range(groups)]
                start = pl.multiple_of(k * groups, groups)
                o_ref[:, pl.ds(start, groups), :] = jnp.concatenate(rows, axis=1)
                return carry

            lax.fori_loop(0, cpg, body, 0)

    return kernel


def _pick_tiles(B, C, T, itemsize, vmem_budget_bytes, target_block_bytes,
                t_tile, b_tile):
    """Choose (b_tile, t_tile, padded_T, need_pad) aiming for ~1-2 MiB blocks."""
    c_pad = _round_up(C, 8)                              # sublane padding of C
    per_block_cap = max(vmem_budget_bytes // 4,          # 2 in + 2 out buffers
                        c_pad * 128 * itemsize)

    pad_t = False
    t_run = T
    if t_tile is None:
        if T % 128 == 0:
            cands = [d for d in range(128, T + 1, 128) if T % d == 0]
        elif c_pad * T * itemsize <= per_block_cap:
            cands = [T]                                   # small ragged T: one full block
        else:                                             # big ragged T: pad to lane-dense tiles
            pad_t = True
            t_run = _round_up(T, 128)
            cands = [d for d in range(128, t_run + 1, 128) if t_run % d == 0]
        t_tile = max((d for d in cands if c_pad * d * itemsize <= per_block_cap),
                     default=min(cands))
    else:
        assert T % t_tile == 0, "t_tile must divide T"

    if b_tile is None:
        base = c_pad * t_tile * itemsize
        divs = [d for d in range(1, B + 1) if B % d == 0]
        fitting = [d for d in divs if d * base <= per_block_cap] or [1]
        reaching = [d for d in fitting if d * base >= target_block_bytes]
        b_tile = min(reaching) if reaching else max(fitting)
        # Keep >= 2 grid steps when possible so both v7x TensorCores get work.
        while b_tile > 1 and (B // b_tile) * (t_run // t_tile) < 2:
            b_tile = max(d for d in divs if d < b_tile)
    else:
        assert B % b_tile == 0, "b_tile must divide B"

    return b_tile, t_tile, t_run, pad_t


def _group_shuffle_call(x, groups, *, t_tile, b_tile, vmem_budget_bytes,
                        target_block_bytes):
    B, C, T = x.shape
    cpg = C // groups
    itemsize = jnp.dtype(x.dtype).itemsize
    b_tile, t_tile, t_run, pad_t = _pick_tiles(
        B, C, T, itemsize, vmem_budget_bytes, target_block_bytes, t_tile, b_tile)

    if pad_t:
        x = jnp.pad(x, ((0, 0), (0, 0), (0, t_run - T)))

    # 2 input + 2 output double-buffered blocks (C padded to sublanes).
    footprint = 4 * b_tile * _round_up(C, 8) * t_tile * itemsize
    params = dict(dimension_semantics=("parallel", "parallel"))
    if footprint > 12 * 1024 * 1024:
        # Blocks beyond the smallest scoped-VMEM default: tell Mosaic explicitly
        # (leave headroom for internal scratch).
        params["vmem_limit_bytes"] = min(int(footprint * 1.25) + (2 << 20), 100 << 20)

    out = pl.pallas_call(
        _make_kernel(groups, cpg),
        out_shape=jax.ShapeDtypeStruct((B, C, t_run), x.dtype),
        grid=(B // b_tile, t_run // t_tile),
        in_specs=[pl.BlockSpec((b_tile, C, t_tile), lambda b, t: (b, 0, t))],
        out_specs=pl.BlockSpec((b_tile, C, t_tile), lambda b, t: (b, 0, t)),
        compiler_params=pltpu.CompilerParams(**params),
    )(x)

    if pad_t:
        out = out[:, :, :T]
    return out


def group_shuffle_pallas(x: jax.Array, groups: int, *,
                         t_tile: int | None = None,
                         b_tile: int | None = None,
                         vmem_budget_bytes: int = 12 * 1024 * 1024,
                         target_block_bytes: int = 2 * 1024 * 1024) -> jax.Array:
    """Apply GroupShuffle to x of shape (B, C, T)."""
    B, C, T = x.shape
    assert C % groups == 0, "channels must be divisible by groups"
    cpg = C // groups

    # Identity permutation: skip the HBM round trip entirely.
    if groups == 1 or cpg == 1:
        return x

    kw = dict(t_tile=t_tile, b_tile=b_tile, vmem_budget_bytes=vmem_budget_bytes,
              target_block_bytes=target_block_bytes)

    itemsize = jnp.dtype(x.dtype).itemsize
    if itemsize in (1, 2) and x.dtype.kind != "b" and T % (4 // itemsize) == 0:
        # Packed dtype: shuffle a uint32 view so channel moves never split
        # packed sublane rows; bit-exact round trip.
        pack = 4 // itemsize
        x32 = lax.bitcast_convert_type(x.reshape(B, C, T // pack, pack), jnp.uint32)
        y32 = _group_shuffle_call(x32, groups, **kw)
        return lax.bitcast_convert_type(y32, x.dtype).reshape(B, C, T)
    # TODO(synk): packed dtypes with T not divisible by the pack factor fall
    # back to the native-dtype kernel (extra sublane unpack/repack work).
    return _group_shuffle_call(x, groups, **kw)


def group_shuffle_ref(x: jax.Array, groups: int) -> jax.Array:
    """Pure-JAX reference mirroring the PyTorch forward exactly."""
    B, C, T = x.shape
    cpg = C // groups
    y = x.reshape(-1, groups, cpg, T)
    y = jnp.swapaxes(y, 1, 2)
    return y.reshape(-1, groups * cpg, T)


if __name__ == "__main__":
    key = jax.random.PRNGKey(0)

    cases = [
        # (B, C, T, groups, dtype)
        (2, 8, 384, 2, jnp.float32),   # lane-dense T
        (2, 8, 16, 4, jnp.float32),    # tiny ragged T -> single full-T block
        (4, 8, 256, 2, jnp.float32),   # batch folded into the block (b_tile > 1)
        (2, 6, 256, 3, jnp.float32),   # C not a multiple of 8 (sublane padding)
        (2, 8, 384, 4, jnp.bfloat16),  # packed dtype -> uint32 view path
        (2, 8, 256, 2, jnp.int8),      # packed dtype (x4) -> uint32 view path
        (2, 8, 15, 2, jnp.bfloat16),   # packed dtype, odd T -> native-dtype path
        (2, 8, 128, 1, jnp.float32),   # groups == 1 -> identity short-circuit
    ]

    for (B, C, T, G, dt) in cases:
        key, sub = jax.random.split(key)
        if jnp.issubdtype(dt, jnp.floating):
            x = jax.random.normal(sub, (B, C, T), dtype=jnp.float32).astype(dt)
        else:
            x = jax.random.randint(sub, (B, C, T), -100, 100, dtype=jnp.int32).astype(dt)

        out = jax.block_until_ready(group_shuffle_pallas(x, G))
        ref = group_shuffle_ref(x, G)

        assert out.shape == (B, C, T), (out.shape, (B, C, T))
        assert out.dtype == x.dtype
        # Pure relabeling of channels -> must match bit-exactly.
        assert bool(jnp.array_equal(out, ref)), (
            f"Pallas GroupShuffle mismatch vs reference for {(B, C, T, G, dt)}"
        )

    print("KERNEL_OK")
</pallas_src>

<mosaic_0001>
module attributes {stable_mosaic.version = 11 : i64} {
  func.func @kernel(%arg0: i32, %arg1: i32, %arg2: memref<1x8x384xf32, #tpu.memory_space<vmem>>, %arg3: memref<1x8x384xf32, #tpu.memory_space<vmem>>) attributes {dimension_semantics = [#tpu.dimension_semantics<parallel>, #tpu.dimension_semantics<parallel>], iteration_bounds = array<i64: 2, 1>, scalar_prefetch = 0 : i64, scratch_operands = 0 : i64, tpu.core_type = #tpu.core_type<tc>, window_params = [{transform_indices = @transform_0, window_bounds = array<i64: 1, 8, 384>}, {transform_indices = @transform_1, window_bounds = array<i64: 1, 8, 384>}]} {
    %c0 = arith.constant 0 : index
    %c0_0 = arith.constant 0 : index
    %c0_1 = arith.constant 0 : index
    %0 = vector.load %arg2[%c0, %c0_0, %c0_1] : memref<1x8x384xf32, #tpu.memory_space<vmem>>, vector<1x1x384xf32>
    %c0_2 = arith.constant 0 : index
    %c4 = arith.constant 4 : index
    %c0_3 = arith.constant 0 : index
    %1 = vector.load %arg2[%c0_2, %c4, %c0_3] : memref<1x8x384xf32, #tpu.memory_space<vmem>>, vector<1x1x384xf32>
    %2 = tpu.concatenate %0, %1 in 1 : vector<1x1x384xf32>, vector<1x1x384xf32> -> vector<1x2x384xf32>
    %c0_4 = arith.constant 0 : index
    %c0_5 = arith.constant 0 : index
    %c0_6 = arith.constant 0 : index
    %3 = vector.load %arg3[%c0_4, %c0_5, %c0_6] : memref<1x8x384xf32, #tpu.memory_space<vmem>>, vector<1x2x384xf32>
    tpu.vector_store %arg3[%c0_4, %c0_5, %c0_6], %2 {strides = array<i32>} : memref<1x8x384xf32, #tpu.memory_space<vmem>>, vector<1x2x384xf32>,
    %c0_7 = arith.constant 0 : index
    %c1 = arith.constant 1 : index
    %c0_8 = arith.constant 0 : index
    %4 = vector.load %arg2[%c0_7, %c1, %c0_8] : memref<1x8x384xf32, #tpu.memory_space<vmem>>, vector<1x1x384xf32>
    %c0_9 = arith.constant 0 : index
    %c5 = arith.constant 5 : index
    %c0_10 = arith.constant 0 : index
    %5 = vector.load %arg2[%c0_9, %c5, %c0_10] : memref<1x8x384xf32, #tpu.memory_space<vmem>>, vector<1x1x384xf32>
    %6 = tpu.concatenate %4, %5 in 1 : vector<1x1x384xf32>, vector<1x1x384xf32> -> vector<1x2x384xf32>
    %c0_11 = arith.constant 0 : index
    %c2 = arith.constant 2 : index
    %c0_12 = arith.constant 0 : index
    %7 = vector.load %arg3[%c0_11, %c2, %c0_12] : memref<1x8x384xf32, #tpu.memory_space<vmem>>, vector<1x2x384xf32>
    tpu.vector_store %arg3[%c0_11, %c2, %c0_12], %6 {strides = array<i32>} : memref<1x8x384xf32, #tpu.memory_space<vmem>>, vector<1x2x384xf32>,
    %c0_13 = arith.constant 0 : index
    %c2_14 = arith.constant 2 : index
    %c0_15 = arith.constant 0 : index
    %8 = vector.load %arg2[%c0_13, %c2_14, %c0_15] : memref<1x8x384xf32, #tpu.memory_space<vmem>>, vector<1x1x384xf32>
    %c0_16 = arith.constant 0 : index
    %c6 = arith.constant 6 : index
    %c0_17 = arith.constant 0 : index
    %9 = vector.load %arg2[%c0_16, %c6, %c0_17] : memref<1x8x384xf32, #tpu.memory_space<vmem>>, vector<1x1x384xf32>
    %10 = tpu.concatenate %8, %9 in 1 : vector<1x1x384xf32>, vector<1x1x384xf32> -> vector<1x2x384xf32>
    %c0_18 = arith.constant 0 : index
    %c4_19 = arith.constant 4 : index
    %c0_20 = arith.constant 0 : index
    %11 = vector.load %arg3[%c0_18, %c4_19, %c0_20] : memref<1x8x384xf32, #tpu.memory_space<vmem>>, vector<1x2x384xf32>
    tpu.vector_store %arg3[%c0_18, %c4_19, %c0_20], %10 {strides = array<i32>} : memref<1x8x384xf32, #tpu.memory_space<vmem>>, vector<1x2x384xf32>,
    %c0_21 = arith.constant 0 : index
    %c3 = arith.constant 3 : index
    %c0_22 = arith.constant 0 : index
    %12 = vector.load %arg2[%c0_21, %c3, %c0_22] : memref<1x8x384xf32, #tpu.memory_space<vmem>>, vector<1x1x384xf32>
    %c0_23 = arith.constant 0 : index
    %c7 = arith.constant 7 : index
    %c0_24 = arith.constant 0 : index
    %13 = vector.load %arg2[%c0_23, %c7, %c0_24] : memref<1x8x384xf32, #tpu.memory_space<vmem>>, vector<1x1x384xf32>
    %14 = tpu.concatenate %12, %13 in 1 : vector<1x1x384xf32>, vector<1x1x384xf32> -> vector<1x2x384xf32>
    %c0_25 = arith.constant 0 : index
    %c6_26 = arith.constant 6 : index
    %c0_27 = arith.constant 0 : index
    %15 = vector.load %arg3[%c0_25, %c6_26, %c0_27] : memref<1x8x384xf32, #tpu.memory_space<vmem>>, vector<1x2x384xf32>
    tpu.vector_store %arg3[%c0_25, %c6_26, %c0_27], %14 {strides = array<i32>} : memref<1x8x384xf32, #tpu.memory_space<vmem>>, vector<1x2x384xf32>,
    return
  }
  func.func @transform_0(%arg0: i32, %arg1: i32) -> (i32, i32, i32) {
    %c0_i32 = arith.constant 0 : i32
    %c0_i32_0 = arith.constant 0 : i32
    return %arg0, %c0_i32, %arg1 : i32, i32, i32
  }
  func.func @transform_1(%arg0: i32, %arg1: i32) -> (i32, i32, i32) {
    %c0_i32 = arith.constant 0 : i32
    %c0_i32_0 = arith.constant 0 : i32
    return %arg0, %c0_i32, %arg1 : i32, i32, i32
  }
}

</mosaic_0001>

<llo_original>
// kernel: tpu_custom_call.1
$region0: #{tpu_custom_call.1}
  #allocation0 [shape = 'u32[]', space=smem, size = 0x4, offset = 0x4, fixed_abs, tag = 'smem constant byte address 0x4 - core index']
  #allocation1 [shape = 'u32[144,128]{1,0:T(1,128)}', space=vmem, size = 0x12000, scoped, tag = 'internal scratch']
  %s0 = inlined_call_operand.hbm [shape: f32[2,8,384], index: 0, kind: input, shape index: {}]
  %s1 = inlined_call_operand.hbm [shape: f32[2,8,384], index: 1, kind: output, shape index: {}]
  %s2 = sld [smem:[#allocation0]]
  $region41: #{tpu_custom_call.1} parent=0
    _
  %s4 = ssub.s32 1, %s2
  %s5 = scalar_select 0, %s4, %s2
  $region1: #{tpu_custom_call.1} parent=0
    #allocation2 [shape = 'u8[24576]{0}', space=vmem, size = 0x6000, scoped, tag = 'input window, operand 0']
    #allocation3 [shape = 's32[2]{0}', space=sflag, size = 0x8, scoped, tag = 'scoped memory for tpu_custom_call.1']
    #allocation4 [shape = 's32[2]{0}', space=sflag, size = 0x8, scoped, tag = 'scoped memory for tpu_custom_call.1']
    #allocation5 [shape = 'u8[24576]{0}', space=vmem, size = 0x6000, scoped, tag = 'output window, operand 0']
    %6 = vsyncpa [#allocation3], 0
    %s7 = scalar_lea.sflag [#allocation3], 1
    %8 = vsyncpa %s7, 0
    %9 = vsyncpa [#allocation4], 0
    %s10 = scalar_lea.sflag [#allocation4], 1
    %11 = vsyncpa %s10, 0
    loop: start=0, step=1, limit=4
    $region2: #{tpu_custom_call.1} parent=1 // loop_pre_header
      _
    $region3: #{tpu_custom_call.1} parent=1 // loop_header
      %s13 = sphi 0, %s17
      %p14 = scmp.ge.s32.totalorder %s13, 4
      %s20 = sphi 0, %s32
      %s21 = sphi 0, %s28
      %s22 = sphi 0, %s20
      %s23 = sphi 0, %s21
      %s24 = sphi 0, %s22
      %s25 = sphi 0, %s23
      %s37 = sphi 0, %s39
      %s40 = sphi 0, %s37
      %s41 = sphi 0, %s40
      %s57 = sphi 0, %s41
      %s65 = sphi 0, %s67
      %s68 = sphi 0, %s65
      %s69 = sphi 0, %s68
      %s85 = sphi 0, %s69
    $region4: #{tpu_custom_call.1} parent=1 // loop_header_branch
      %16 = sbr.rel (%p14) target = $region8
    $region5: #{tpu_custom_call.1} parent=1 // loop_body
      %s18 = ssub.s32 %s13, 1
      %s19 = ssub.s32 %s13, 2
      %s26 = sadd.s32 1, %s21
      %p27 = scmp.ge.s32.totalorder %s26, 1
      %s28 = scalar_select %p27, 0, %s26
      %s29 = sadd.s32 1, %s20
      %s30 = scalar_select %p27, %s29, %s20
      %p31 = scmp.ge.s32.totalorder %s30, 2
      %s32 = scalar_select %p31, 0, %s30
      %s33 = ssub.s32 %s20, %s32
      %s34 = ssub.s32 %s21, %s28
      %s35 = sor.u32 %s33, %s34
      %p36 = scmp.eq.s32.totalorder %s35, 0
      %s38 = sadd.s32 %s37, 1
      %s39 = scalar_select %p36, %s37, %s38
      %p42 = pneg %p36
      %p43 = scmp.eq.s32.totalorder %s13, 1
      %p44 = por %p42, %p43
      %p45 = scmp.ne.s32.totalorder %s37, %s40
      %p46 = scmp.eq.s32.totalorder %s13, 0
      %p47 = por %p45, %p46
      %p48 = scmp.ne.s32.totalorder %s37, %s40
      %p49 = scmp.eq.s32.totalorder %s18, 1
      %p50 = por %p48, %p49
      %p51 = scmp.ne.s32.totalorder %s40, %s41
      %p52 = scmp.eq.s32.totalorder %s18, 0
      %p53 = por %p51, %p52
      %p54 = scmp.ne.s32.totalorder %s40, %s41
      %p55 = scmp.eq.s32.totalorder %s19, 1
      %p56 = por %p54, %p55
      %p58 = scmp.ne.s32.totalorder %s41, %s57
      %p59 = scmp.eq.s32.totalorder %s19, 0
      %p60 = por %p58, %p59
      %s61 = ssub.s32 %s20, %s32
      %s62 = ssub.s32 %s21, %s28
      %s63 = sor.u32 %s61, %s62
      %p64 = scmp.eq.s32.totalorder %s63, 0
      %s66 = sadd.s32 %s65, 1
      %s67 = scalar_select %p64, %s65, %s66
      %p70 = pneg %p64
      %p71 = scmp.eq.s32.totalorder %s13, 1
      %p72 = por %p70, %p71
      %p73 = scmp.ne.s32.totalorder %s65, %s68
      %p74 = scmp.eq.s32.totalorder %s13, 0
      %p75 = por %p73, %p74
      %p76 = scmp.ne.s32.totalorder %s65, %s68
      %p77 = scmp.eq.s32.totalorder %s18, 1
      %p78 = por %p76, %p77
      %p79 = scmp.ne.s32.totalorder %s68, %s69
      %p80 = scmp.eq.s32.totalorder %s18, 0
      %p81 = por %p79, %p80
      %p82 = scmp.ne.s32.totalorder %s68, %s69
      %p83 = scmp.eq.s32.totalorder %s19, 1
      %p84 = por %p82, %p83
      %p86 = scmp.ne.s32.totalorder %s69, %s85
      %p87 = scmp.eq.s32.totalorder %s19, 0
      %p88 = por %p86, %p87
      %p89 = scmp.le.s32.totalorder 1, %s13
      %p90 = scmp.lt.s32.totalorder %s13, 3
      %p91 = pnand %p89, %p90
      %p92 = pneg %p91
      // Predicated region
      $region9: #{tpu_custom_call.1} parent=5 // pred_check
        _
      $region10: #{tpu_custom_call.1} parent=5 // pred_check_branch
        %94 = sbr.rel (%p91) target = $region12
      $region11: #{tpu_custom_call.1} parent=5 // pred_region
        %s95 = ssub.s32 %s13, 1
      $region12: #{tpu_custom_call.1} parent=5 // pred_fallthru
        _
      %p96 = scmp.lt.s32.totalorder %s13, 2
      // Predicated region
      $region13: #{tpu_custom_call.1} parent=5 // pred_check
        %p97 = pneg %p96
      $region14: #{tpu_custom_call.1} parent=5 // pred_check_branch
        %99 = sbr.rel (%p97) target = $region16
      $region15: #{tpu_custom_call.1} parent=5 // pred_region
        // Predicated region
        $region17: #{tpu_custom_call.1} parent=15 // pred_check
          %p100 = pneg %p47
        $region18: #{tpu_custom_call.1} parent=15 // pred_check_branch
          %102 = sbr.rel (%p100) target = $region20
        $region19: #{tpu_custom_call.1} parent=15 // pred_region
          %s103 = sand.u32 %s37, 1
          %s104 = scalar_lea.sflag [#allocation3], %s103
          %s105 = sand.u32 %s37, 1
          %s106 = smul.addr %s105, 24
          %s107 = scalar_lea.vmem [#allocation2], %s106
          %s108 = smul.u32 3, %s21
          %s110 = ssub.s32 384, 384
          %111 = vsyncadd %s104, %s110
          %s112 = smul.addr %s20, 3
          %s113 = sadd.s32 %s108, %s112
          %s114 = smul.addr %s113, 128
          %s115 = scalar_lea.hbm %s0, %s114
          %s117 = sshll.u32 %s107, 4
          %s118 = int_to_ptr.vmem [resolvable:$true] %s117
          %120 = dma.hbm_to_vmem [thread:$0]  %s115, 384, %s118, %s104
        $region20: #{tpu_custom_call.1} parent=15 // pred_fallthru
          _
      $region16: #{tpu_custom_call.1} parent=5 // pred_fallthru
        _
      %p121 = scmp.le.s32.totalorder 1, %s13
      %p122 = scmp.lt.s32.totalorder %s13, 3
      %p123 = pnand %p121, %p122
      %p124 = pneg %p123
      // Predicated region
      $region21: #{tpu_custom_call.1} parent=5 // pred_check
        _
      $region22: #{tpu_custom_call.1} parent=5 // pred_check_branch
        %126 = sbr.rel (%p123) target = $region24
      $region23: #{tpu_custom_call.1} parent=5 // pred_region
        %s127 = ssub.s32 %s13, 1
        %s128 = sand.u32 %s40, 1
        %s129 = scalar_lea.sflag [#allocation3], %s128
        %s130 = sand.u32 %s40, 1
        %s131 = smul.addr %s130, 24
        %s132 = scalar_lea.vmem [#allocation2], %s131
        // Predicated region
        $region25: #{tpu_custom_call.1} parent=23 // pred_check
          %p133 = pneg %p53
        $region26: #{tpu_custom_call.1} parent=23 // pred_check_branch
          %135 = sbr.rel (%p133) target = $region28
        $region27: #{tpu_custom_call.1} parent=23 // pred_region
          %136 = dma.done %s129, 384
        $region28: #{tpu_custom_call.1} parent=23 // pred_fallthru
          _
        %s137 = sand.u32 %s40, 1
        %s138 = scalar_lea.sflag [#allocation3], %s137
        %s139 = sand.u32 %s40, 1
        %s140 = smul.addr %s139, 24
        %s141 = scalar_lea.vmem [#allocation2], %s140
        %p142 = pneg %p53
        %p143 = pneg %p50
        %p144 = pneg %p81
        %p145 = pneg %p78
        %s146 = sand.u32 %s68, 1
        %s147 = scalar_lea.sflag [#allocation4], %s146
        %s148 = sand.u32 %s68, 1
        %s149 = smul.addr %s148, 24
        %s150 = scalar_lea.vmem [#allocation5], %s149
        %s151 = smul.u32 3, %s23
        %s152 = smul.u32 3, %s23
        %v153 = vld [vmem:[%s132] ss:$8 sm:$0x7]
        %s154 = scalar_lea.vmem %s132, 4 [#allocation2]
        %v155 = vld [vmem:[%s154] ss:$8 sm:$0x7]
        %v157 = vlaneseq
        %v158 = vshrl.u32 %v157, 7
        %v159 = vsub.s32 0, %v158
        %v160 = vrot.slane %v153, %v159
        %v161 = vlaneseq
        %v162 = vshrl.u32 %v161, 7
        %v163 = vsub.s32 1, %v162
        %v164 = vrot.slane %v153, %v163
        %v165 = vlaneseq
        %v166 = vshrl.u32 %v165, 7
        %v167 = vsub.s32 2, %v166
        %v168 = vrot.slane %v153, %v167
        %v173 = vlaneseq
        %v174 = vshrl.u32 %v173, 7
        %v175 = vsub.s32 0, %v174
        %v176 = vrot.slane %v155, %v175
        %v177 = vlaneseq
        %v178 = vshrl.u32 %v177, 7
        %v179 = vsub.s32 1, %v178
        %v180 = vrot.slane %v155, %v179
        %v181 = vlaneseq
        %v182 = vshrl.u32 %v181, 7
        %v183 = vsub.s32 2, %v182
        %v184 = vrot.slane %v155, %v183
        %vm188 = vcmask 1040384
        %v189 = vsel %vm188, %v160, %v176
        %v190 = vsel %vm188, %v164, %v180
        %v191 = vsel %vm188, %v168, %v184
        %192 = vst [vmem:[%s150] sm:$0x3] %v189
        %193 = vst [vmem:[%s150 + $0x8] sm:$0x3] %v190
        %194 = vst [vmem:[%s150 + $0x10] sm:$0x3] %v191
        %s195 = scalar_lea.vmem %s132, 1 [#allocation2]
        %v196 = vld [vmem:[%s195] ss:$8 sm:$0x7]
        %s197 = scalar_lea.vmem %s132, 5 [#allocation2]
        %v198 = vld [vmem:[%s197] ss:$8 sm:$0x7]
        %v200 = vlaneseq
        %v201 = vshrl.u32 %v200, 7
        %v202 = vsub.s32 0, %v201
        %v203 = vrot.slane %v196, %v202
        %v204 = vlaneseq
        %v205 = vshrl.u32 %v204, 7
        %v206 = vsub.s32 1, %v205
        %v207 = vrot.slane %v196, %v206
        %v208 = vlaneseq
        %v209 = vshrl.u32 %v208, 7
        %v210 = vsub.s32 2, %v209
        %v211 = vrot.slane %v196, %v210
        %v216 = vlaneseq
        %v217 = vshrl.u32 %v216, 7
        %v218 = vsub.s32 0, %v217
        %v219 = vrot.slane %v198, %v218
        %v220 = vlaneseq
        %v221 = vshrl.u32 %v220, 7
        %v222 = vsub.s32 1, %v221
        %v223 = vrot.slane %v198, %v222
        %v224 = vlaneseq
        %v225 = vshrl.u32 %v224, 7
        %v226 = vsub.s32 2, %v225
        %v227 = vrot.slane %v198, %v226
        %v231 = vsel %vm188, %v203, %v219
        %v232 = vsel %vm188, %v207, %v223
        %v233 = vsel %vm188, %v211, %v227
        %v237 = vrot.slane %v231, 6
        %v238 = vrot.slane %v232, 6
        %v239 = vrot.slane %v233, 6
        %243 = vst [vmem:[%s150] sm:$0xc] %v237
        %244 = vst [vmem:[%s150 + $0x8] sm:$0xc] %v238
        %245 = vst [vmem:[%s150 + $0x10] sm:$0xc] %v239
        %s246 = scalar_lea.vmem %s132, 2 [#allocation2]
        %v247 = vld [vmem:[%s246] ss:$8 sm:$0x7]
        %s248 = scalar_lea.vmem %s132, 6 [#allocation2]
        %v249 = vld [vmem:[%s248] ss:$8 sm:$0x7]
        %v251 = vlaneseq
        %v252 = vshrl.u32 %v251, 7
        %v253 = vsub.s32 0, %v252
        %v254 = vrot.slane %v247, %v253
        %v255 = vlaneseq
        %v256 = vshrl.u32 %v255, 7
        %v257 = vsub.s32 1, %v256
        %v258 = vrot.slane %v247, %v257
        %v259 = vlaneseq
        %v260 = vshrl.u32 %v259, 7
        %v261 = vsub.s32 2, %v260
        %v262 = vrot.slane %v247, %v261
        %v267 = vlaneseq
        %v268 = vshrl.u32 %v267, 7
        %v269 = vsub.s32 0, %v268
        %v270 = vrot.slane %v249, %v269
        %v271 = vlaneseq
        %v272 = vshrl.u32 %v271, 7
        %v273 = vsub.s32 1, %v272
        %v274 = vrot.slane %v249, %v273
        %v275 = vlaneseq
        %v276 = vshrl.u32 %v275, 7
        %v277 = vsub.s32 2, %v276
        %v278 = vrot.slane %v249, %v277
        %v282 = vsel %vm188, %v254, %v270
        %v283 = vsel %vm188, %v258, %v274
        %v284 = vsel %vm188, %v262, %v278
        %v288 = vrot.slane %v282, 4
        %v289 = vrot.slane %v283, 4
        %v290 = vrot.slane %v284, 4
        %294 = vst [vmem:[%s150] sm:$0x30] %v288
        %295 = vst [vmem:[%s150 + $0x8] sm:$0x30] %v289
        %296 = vst [vmem:[%s150 + $0x10] sm:$0x30] %v290
        %s297 = scalar_lea.vmem %s132, 3 [#allocation2]
        %v298 = vld [vmem:[%s297] ss:$8 sm:$0x7]
        %s299 = scalar_lea.vmem %s132, 7 [#allocation2]
        %v300 = vld [vmem:[%s299] ss:$8 sm:$0x7]
        %v302 = vlaneseq
        %v303 = vshrl.u32 %v302, 7
        %v304 = vsub.s32 0, %v303
        %v305 = vrot.slane %v298, %v304
        %v306 = vlaneseq
        %v307 = vshrl.u32 %v306, 7
        %v308 = vsub.s32 1, %v307
        %v309 = vrot.slane %v298, %v308
        %v310 = vlaneseq
        %v311 = vshrl.u32 %v310, 7
        %v312 = vsub.s32 2, %v311
        %v313 = vrot.slane %v298, %v312
        %v318 = vlaneseq
        %v319 = vshrl.u32 %v318, 7
        %v320 = vsub.s32 0, %v319
        %v321 = vrot.slane %v300, %v320
        %v322 = vlaneseq
        %v323 = vshrl.u32 %v322, 7
        %v324 = vsub.s32 1, %v323
        %v325 = vrot.slane %v300, %v324
        %v326 = vlaneseq
        %v327 = vshrl.u32 %v326, 7
        %v328 = vsub.s32 2, %v327
        %v329 = vrot.slane %v300, %v328
        %v333 = vsel %vm188, %v305, %v321
        %v334 = vsel %vm188, %v309, %v325
        %v335 = vsel %vm188, %v313, %v329
        %v339 = vrot.slane %v333, 2
        %v340 = vrot.slane %v334, 2
        %v341 = vrot.slane %v335, 2
        %345 = vst [vmem:[%s150] sm:$0xc0] %v339
        %346 = vst [vmem:[%s150 + $0x8] sm:$0xc0] %v340
        %347 = vst [vmem:[%s150 + $0x10] sm:$0xc0] %v341
        %s348 = sand.u32 %s68, 1
        %s349 = scalar_lea.sflag [#allocation4], %s348
        %s350 = sand.u32 %s68, 1
        %s351 = smul.addr %s350, 24
        %s352 = scalar_lea.vmem [#allocation5], %s351
        // Predicated region
        $region29: #{tpu_custom_call.1} parent=23 // pred_check
          %p353 = pneg %p78
        $region30: #{tpu_custom_call.1} parent=23 // pred_check_branch
          %355 = sbr.rel (%p353) target = $region32
        $region31: #{tpu_custom_call.1} parent=23 // pred_region
          %s356 = smul.u32 3, %s23
          %s358 = ssub.s32 384, 384
          %359 = vsyncadd %s349, %s358
          %s360 = smul.addr %s22, 3
          %s361 = sadd.s32 %s356, %s360
          %s362 = smul.addr %s361, 128
          %s363 = scalar_lea.hbm %s1, %s362
          %s365 = sshll.u32 %s352, 4
          %s366 = int_to_ptr.vmem [resolvable:$true] %s365
          %368 = dma.vmem_to_hbm [thread:$0]  %s366, 384, %s363, %s349
        $region32: #{tpu_custom_call.1} parent=23 // pred_fallthru
          _
      $region24: #{tpu_custom_call.1} parent=5 // pred_fallthru
        _
      %p369 = scmp.le.s32.totalorder 2, %s13
      // Predicated region
      $region33: #{tpu_custom_call.1} parent=5 // pred_check
        %p370 = pneg %p369
      $region34: #{tpu_custom_call.1} parent=5 // pred_check_branch
        %372 = sbr.rel (%p370) target = $region36
      $region35: #{tpu_custom_call.1} parent=5 // pred_region
        %s373 = ssub.s32 %s13, 2
        // Predicated region
        $region37: #{tpu_custom_call.1} parent=35 // pred_check
          %p374 = pneg %p84
        $region38: #{tpu_custom_call.1} parent=35 // pred_check_branch
          %376 = sbr.rel (%p374) target = $region40
        $region39: #{tpu_custom_call.1} parent=35 // pred_region
          %s377 = sand.u32 %s69, 1
          %s378 = scalar_lea.sflag [#allocation4], %s377
          %s379 = sand.u32 %s69, 1
          %s380 = smul.addr %s379, 24
          %s381 = scalar_lea.vmem [#allocation5], %s380
          %382 = dma.done %s378, 384
        $region40: #{tpu_custom_call.1} parent=35 // pred_fallthru
          _
      $region36: #{tpu_custom_call.1} parent=5 // pred_fallthru
        _
    $region6: #{tpu_custom_call.1} parent=1 // loop_footer
      %s17 = sadd.s32 1, %s13
    $region7: #{tpu_custom_call.1} parent=1 // loop_footer_branch
      %12 = sbr.rel target = $region3
    $region8: #{tpu_custom_call.1} parent=1 // loop_exit
      _
    %383 = vsyncpa [#allocation3], 1
    %s384 = scalar_lea.sflag [#allocation3], 1
    %385 = vsyncpa %s384, 1
    %386 = vsyncpa [#allocation4], 1
    %s387 = scalar_lea.sflag [#allocation4], 1
    %388 = vsyncpa %s387, 1

</llo_original>
